<compile_context>
chip_gen: v6e
topology: v6e:2x2x1
jax: 0.10.0
libtpu: 0.0.40
codegen_flags: <defaults>
</compile_context>

<pallas_src>
import functools

import jax
import jax.numpy as jnp
from jax.experimental import pallas as pl
from jax.experimental.pallas import tpu as pltpu


def _zero_one_loss_kernel(z_ref, y_ref, partial_ref, *, tile_rows, total_rows):
    i = pl.program_id(0)

    # Cast in-kernel (free VPU work); HBM traffic stays at the input dtypes.
    z = z_ref[...].astype(jnp.float32)
    y = y_ref[...].astype(jnp.float32)

    y_signed = y * 2.0 - 1.0                       # {0,1} -> {-1,+1}
    prod = z * y_signed
    # torch.heaviside(-prod, 0) == 1.0 where prod < 0, else 0.0 (incl. prod == 0)
    ind = jnp.where(prod < 0.0, 1.0, 0.0)

    # Mask rows past the end of the array (last, possibly partial, block).
    row_ids = i * tile_rows + jax.lax.broadcasted_iota(jnp.int32, ind.shape, 0)
    ind = jnp.where(row_ids < total_rows, ind, 0.0)

    # One cross-lane reduce per (multi-MiB) tile; independent per grid block.
    partial_ref[0, 0] = jnp.sum(ind)


def zero_one_loss(z, y, *, target_tile_bytes=4 << 20):
    assert z.shape == y.shape and z.ndim == 2
    M, N = z.shape

    # Pick the largest row tile with ~target_tile_bytes per input (multiple of 8).
    # 2 inputs x 2 pipeline buffers x 4 MiB = 16 MiB -> fits v5e/v6e/v7x scoped VMEM.
    bytes_per_row = N * max(jnp.dtype(z.dtype).itemsize, jnp.dtype(y.dtype).itemsize)
    tile_rows = max(8, (target_tile_bytes // bytes_per_row) // 8 * 8)
    m_padded = ((M + 7) // 8) * 8
    tile_rows = min(tile_rows, m_padded)
    num_blocks = pl.cdiv(M, tile_rows)

    kernel = functools.partial(
        _zero_one_loss_kernel, tile_rows=tile_rows, total_rows=M
    )

    partials = pl.pallas_call(
        kernel,
        out_shape=jax.ShapeDtypeStruct((num_blocks, 1), jnp.float32),
        grid_spec=pltpu.PrefetchScalarGridSpec(
            num_scalar_prefetch=0,
            grid=(num_blocks,),
            in_specs=[
                pl.BlockSpec((tile_rows, N), lambda i: (i, 0)),
                pl.BlockSpec((tile_rows, N), lambda i: (i, 0)),
            ],
            out_specs=pl.BlockSpec(
                (1, 1), lambda i: (i, 0), memory_space=pltpu.SMEM
            ),
        ),
        compiler_params=pltpu.CompilerParams(
            dimension_semantics=("parallel",),      # independent blocks -> both TCs on v7x
            vmem_limit_bytes=32 * 1024 * 1024,      # big tiles fit on v5e/v6e/v7x
        ),
    )(z, y)

    # Tiny final reduction + mean scale in plain JAX.
    return jnp.sum(partials) * jnp.float32(1.0 / (M * N))


if __name__ == "__main__":
    key = jax.random.PRNGKey(0)
    kz, ky = jax.random.split(key)

    # Small demo shape; M=20 exercises the partial-last-block row mask,
    # N=96 exercises a non-128-multiple (full-extent) last dim.
    M, N = 20, 96
    z = jax.random.normal(kz, (M, N), dtype=jnp.float32)             # logits
    y = (jax.random.uniform(ky, (M, N)) > 0.5).astype(jnp.float32)   # {0,1} labels

    loss = zero_one_loss(z, y)
    jax.block_until_ready(loss)

    # Reference check in plain JAX (same heaviside semantics as the torch module).
    y_signed = y * 2.0 - 1.0
    ref = jnp.mean(jnp.where(z * y_signed < 0.0, 1.0, 0.0))
    assert jnp.allclose(loss, ref, atol=1e-6), (loss, ref)

    print("KERNEL_OK")
</pallas_src>

<mosaic_0001>
module attributes {stable_mosaic.version = 11 : i64} {
  func.func @_zero_one_loss_kernel(%arg0: i32, %arg1: memref<24x96xf32, #tpu.memory_space<vmem>>, %arg2: memref<24x96xf32, #tpu.memory_space<vmem>>, %arg3: memref<1x1xf32, #tpu.memory_space<smem>>) attributes {dimension_semantics = [#tpu.dimension_semantics<parallel>], iteration_bounds = array<i64: 1>, scalar_prefetch = 0 : i64, scratch_operands = 0 : i64, tpu.core_type = #tpu.core_type<tc>, window_params = [{transform_indices = @transform_0, window_bounds = array<i64: 24, 96>}, {transform_indices = @transform_1, window_bounds = array<i64: 24, 96>}, {transform_indices = @transform_2, window_bounds = array<i64: 1, 1>}]} {
    %c0 = arith.constant 0 : index
    %c0_0 = arith.constant 0 : index
    %0 = vector.load %arg1[%c0, %c0_0] : memref<24x96xf32, #tpu.memory_space<vmem>>, vector<24x96xf32>
    %c0_1 = arith.constant 0 : index
    %c0_2 = arith.constant 0 : index
    %1 = vector.load %arg2[%c0_1, %c0_2] : memref<24x96xf32, #tpu.memory_space<vmem>>, vector<24x96xf32>
    %cst = arith.constant 2.000000e+00 : f32
    %2 = vector.broadcast %cst : f32 to vector<24x96xf32>
    %3 = arith.mulf %1, %2 : vector<24x96xf32>
    %cst_3 = arith.constant 1.000000e+00 : f32
    %4 = vector.broadcast %cst_3 : f32 to vector<24x96xf32>
    %5 = arith.subf %3, %4 : vector<24x96xf32>
    %6 = arith.mulf %0, %5 : vector<24x96xf32>
    %cst_4 = arith.constant 0.000000e+00 : f32
    %7 = vector.broadcast %cst_4 : f32 to vector<24x96xf32>
    %8 = arith.cmpf olt, %6, %7 : vector<24x96xf32>
    %cst_5 = arith.constant 1.000000e+00 : f32
    %cst_6 = arith.constant 0.000000e+00 : f32
    %9 = vector.broadcast %cst_5 : f32 to vector<24x96xf32>
    %10 = vector.broadcast %cst_6 : f32 to vector<24x96xf32>
    %11 = arith.select %8, %9, %10 : vector<24x96xi1>, vector<24x96xf32>
    %c24_i32 = arith.constant 24 : i32
    %12 = arith.muli %arg0, %c24_i32 : i32
    %13 = tpu.iota {dimensions = array<i32: 0>} : vector<24x96xi32>
    %14 = vector.broadcast %12 : i32 to vector<24x96xi32>
    %15 = arith.addi %14, %13 : vector<24x96xi32>
    %c20_i32 = arith.constant 20 : i32
    %16 = vector.broadcast %c20_i32 : i32 to vector<24x96xi32>
    %17 = arith.cmpi slt, %15, %16 : vector<24x96xi32>
    %cst_7 = arith.constant 0.000000e+00 : f32
    %18 = vector.broadcast %cst_7 : f32 to vector<24x96xf32>
    %19 = arith.select %17, %11, %18 : vector<24x96xi1>, vector<24x96xf32>
    %20 = vector.shape_cast %19 : vector<24x96xf32> to vector<1x24x96xf32>
    %cst_8 = arith.constant dense<0.000000e+00> : vector<1xf32>
    %21 = vector.multi_reduction <add>, %20, %cst_8 [1, 2] : vector<1x24x96xf32> to vector<1xf32>
    %22 = vector.shape_cast %21 : vector<1xf32> to vector<1x1x1xf32>
    %23 = vector.extract %22[0, 0, 0] : f32 from vector<1x1x1xf32>
    %c0_9 = arith.constant 0 : index
    %c0_10 = arith.constant 0 : index
    %24 = memref.load %arg3[%c0_9, %c0_10] : memref<1x1xf32, #tpu.memory_space<smem>>
    memref.store %23, %arg3[%c0_9, %c0_10] : memref<1x1xf32, #tpu.memory_space<smem>>
    return
  }
  func.func @transform_0(%arg0: i32) -> (i32, i32) {
    %c0_i32 = arith.constant 0 : i32
    %c0_i32_0 = arith.constant 0 : i32
    return %arg0, %c0_i32 : i32, i32
  }
  func.func @transform_1(%arg0: i32) -> (i32, i32) {
    %c0_i32 = arith.constant 0 : i32
    %c0_i32_0 = arith.constant 0 : i32
    return %arg0, %c0_i32 : i32, i32
  }
  func.func @transform_2(%arg0: i32) -> (i32, i32) {
    %c0_i32 = arith.constant 0 : i32
    %c0_i32_0 = arith.constant 0 : i32
    return %arg0, %c0_i32 : i32, i32
  }
}

</mosaic_0001>

<llo_original>
// kernel: tpu_custom_call.1
$region0: #{tpu_custom_call.1}
  #allocation0 [shape = 'u32[]', space=smem, size = 0x4, offset = 0x4, fixed_abs, tag = 'smem constant byte address 0x4 - core index']
  #allocation1 [shape = 'u32[144,128]{1,0:T(1,128)}', space=vmem, size = 0x12000, scoped, tag = 'internal scratch']
  %s0 = inlined_call_operand.hbm [shape: f32[20,96], index: 0, kind: input, shape index: {}]
  %s1 = inlined_call_operand.hbm [shape: f32[20,96], index: 1, kind: input, shape index: {}]
  %s2 = inlined_call_operand.hbm [shape: f32[1,1], index: 2, kind: output, shape index: {}]
  %s3 = sld [smem:[#allocation0]]
  $region26: #{tpu_custom_call.1} parent=0
    _
  %s5 = ssub.s32 1, %s3
  %s6 = scalar_select 0, %s5, %s3
  $region1: #{tpu_custom_call.1} parent=0
    #allocation2 [shape = 'u8[12288]{0}', space=vmem, size = 0x3000, scoped, tag = 'input window, operand 0, single buffered']
    #allocation3 [shape = 's32[1]{0}', space=sflag, size = 0x4, scoped, tag = 'scoped memory for tpu_custom_call.1']
    #allocation4 [shape = 's32[1]{0}', space=sflag, size = 0x4, scoped, tag = 'scoped memory for tpu_custom_call.1']
    #allocation5 [shape = 'u8[12288]{0}', space=vmem, size = 0x3000, scoped, tag = 'input window, operand 1, single buffered']
    #allocation6 [shape = 's32[1]{0}', space=sflag, size = 0x4, scoped, tag = 'scoped memory for tpu_custom_call.1']
    #allocation7 [shape = 'u8[512]{0}', space=smem, size = 0x200, scoped, tag = 'output window, operand 0, single buffered']
    %7 = vsyncpa [#allocation3], 0
    %8 = vsyncpa [#allocation6], 0
    %9 = vsyncpa [#allocation4], 0
    // Predicated region
    $region2: #{tpu_custom_call.1} parent=1 // pred_check
      _
    $region3: #{tpu_custom_call.1} parent=1 // pred_check_branch
      %11 = sbr.rel (0) target = $region5
    $region4: #{tpu_custom_call.1} parent=1 // pred_region
      %s13 = ssub.s32 384, 384
      %14 = vsyncadd [#allocation3], %s13
      %s15 = sshll.u32 [#allocation2], 4
      %s16 = int_to_ptr.vmem [resolvable:$true] %s15
      %21 = dma.hbm_to_vmem [thread:$0]  %s0, 384, %s16, [#allocation3], 128, 128, 8
    $region5: #{tpu_custom_call.1} parent=1 // pred_fallthru
      _
    // Predicated region
    $region6: #{tpu_custom_call.1} parent=1 // pred_check
      _
    $region7: #{tpu_custom_call.1} parent=1 // pred_check_branch
      %23 = sbr.rel (0) target = $region9
    $region8: #{tpu_custom_call.1} parent=1 // pred_region
      %s25 = ssub.s32 384, 384
      %26 = vsyncadd [#allocation6], %s25
      %s27 = sshll.u32 [#allocation5], 4
      %s28 = int_to_ptr.vmem [resolvable:$true] %s27
      %33 = dma.hbm_to_vmem [thread:$0]  %s1, 384, %s28, [#allocation6], 128, 128, 8
    $region9: #{tpu_custom_call.1} parent=1 // pred_fallthru
      _
    // Predicated region
    $region10: #{tpu_custom_call.1} parent=1 // pred_check
      _
    $region11: #{tpu_custom_call.1} parent=1 // pred_check_branch
      %35 = sbr.rel (0) target = $region13
    $region12: #{tpu_custom_call.1} parent=1 // pred_region
      %36 = dma.done [#allocation3], 384
    $region13: #{tpu_custom_call.1} parent=1 // pred_fallthru
      _
    // Predicated region
    $region14: #{tpu_custom_call.1} parent=1 // pred_check
      _
    $region15: #{tpu_custom_call.1} parent=1 // pred_check_branch
      %38 = sbr.rel (0) target = $region17
    $region16: #{tpu_custom_call.1} parent=1 // pred_region
      %39 = dma.done [#allocation6], 384
    $region17: #{tpu_custom_call.1} parent=1 // pred_fallthru
      _
    %v40 = vld [vmem:[#allocation2] sm:$0xff]
    %v41 = vld [vmem:[#allocation2 + $0x8] sm:$0xff]
    %v42 = vld [vmem:[#allocation2 + $0x10] sm:$0xff]
    %v43 = vld [vmem:[#allocation5] sm:$0xff]
    %v44 = vld [vmem:[#allocation5 + $0x8] sm:$0xff]
    %v45 = vld [vmem:[#allocation5 + $0x10] sm:$0xff]
    %v46 = vmul.f32 %v43, 2.0
    %v47 = vmul.f32 %v44, 2.0
    %v48 = vmul.f32 %v45, 2.0
    %v49 = vsub.f32 %v46, 1.0
    %v50 = vsub.f32 %v47, 1.0
    %v51 = vsub.f32 %v48, 1.0
    %v52 = vmul.f32 %v40, %v49
    %v53 = vmul.f32 %v41, %v50
    %v54 = vmul.f32 %v42, %v51
    %vm55 = vcmp.lt.f32.partialorder %v52, 0.0
    %vm56 = vcmp.lt.f32.partialorder %v53, 0.0
    %vm57 = vcmp.lt.f32.partialorder %v54, 0.0
    %v58 = vsel %vm55, 1.0, 0.0
    %v59 = vsel %vm56, 1.0, 0.0
    %v60 = vsel %vm57, 1.0, 0.0
    %s61 = smul.u32 0, 24
    %v62 = vlaneseq
    %v63 = vshrl.u32 %v62, 7
    %v64 = vadd.s32 %v63, 8
    %v65 = vadd.s32 %v63, 16
    %v66 = vstv %s61
    %v67 = vadd.s32 %v66, %v63
    %v68 = vadd.s32 %v66, %v64
    %v69 = vadd.s32 %v66, %v65
    %vm70 = vcmp.lt.s32.totalorder %v67, 20
    %vm71 = vcmp.lt.s32.totalorder %v68, 20
    %vm72 = vcmp.lt.s32.totalorder %v69, 20
    %v73 = vsel %vm70, %v58, 0.0
    %v74 = vsel %vm71, %v59, 0.0
    %v75 = vsel %vm72, %v60, 0.0
    %vm76 = vcmask 785408
    %v77 = vsel %vm76, %v73, 0.0
    %v78 = vsel %vm76, %v74, 0.0
    %v79 = vadd.f32 %v77, %v78
    %v80 = vsel %vm76, %v75, 0.0
    %v81 = vadd.f32 %v79, %v80
    %82 = vadd.xlane.f32.xlu0 %v81
    %v83 = vpop.xlane.xlu0 %82
    %v84 = vrot.slane %v83, 4
    %v85 = vadd.f32 %v83, %v84
    %v86 = vrot.slane %v85, 2
    %v87 = vadd.f32 %v85, %v86
    %v88 = vrot.slane %v87, 1
    %v89 = vadd.f32 %v87, %v88
    %s90 = vtos %v89
    %s91 = scalar_lea.smem [#allocation7], 0
    %92 = sst [smem:[%s91]] %s90
    // Predicated region
    $region18: #{tpu_custom_call.1} parent=1 // pred_check
      _
    $region19: #{tpu_custom_call.1} parent=1 // pred_check_branch
      %94 = sbr.rel (0) target = $region21
    $region20: #{tpu_custom_call.1} parent=1 // pred_region
      %s96 = ssub.s32 16, 16
      %97 = vsyncadd [#allocation4], %s96
      %100 = dma.smem_to_hbm [#allocation7], 16, %s2, [#allocation4]
    $region21: #{tpu_custom_call.1} parent=1 // pred_fallthru
      _
    // Predicated region
    $region22: #{tpu_custom_call.1} parent=1 // pred_check
      _
    $region23: #{tpu_custom_call.1} parent=1 // pred_check_branch
      %102 = sbr.rel (0) target = $region25
    $region24: #{tpu_custom_call.1} parent=1 // pred_region
      %103 = dma.done [#allocation4], 16
    $region25: #{tpu_custom_call.1} parent=1 // pred_fallthru
      _
    %104 = sfence
    %105 = vsyncpa [#allocation3], 1
    %106 = vsyncpa [#allocation6], 1
    %107 = vsyncpa [#allocation4], 1

</llo_original>
